<compile_context>
chip_gen: v5e
topology: v5e:2x2
jax: 0.10.0
libtpu: 0.0.40
codegen_flags: <defaults>
</compile_context>

<pallas_src>
import math
import jax
import jax.numpy as jnp
from jax.experimental import pallas as pl
from jax.experimental.pallas import tpu as pltpu


def _round_up(x, m):
    return ((x + m - 1) // m) * m


def _mf_dot_kernel(idx_ref, inv_tab_ref, td_tab_ref, out_ref):
    idx = idx_ref[...]                 # (2, TB) int32
    inv_idx = idx[0:1, :]              # (1, TB)
    td_idx = idx[1:2, :]               # (1, TB)
    inv_tab = inv_tab_ref[...]         # (F, R_inv) float32
    td_tab = td_tab_ref[...]           # (F, R_td)  float32

    r_inv = inv_tab.shape[1]
    r_td = td_tab.shape[1]
    tb = idx.shape[1]

    # Transposed one-hot selection masks: (R, TB), 1.0 where row == idx[col].
    # Padded lanes carry index 0 (a valid row); their outputs are sliced off
    # by the wrapper.  Out-of-range indices select no row -> 0.0 (torch would
    # be undefined/error here).
    oh_inv_t = (jax.lax.broadcasted_iota(jnp.int32, (r_inv, tb), 0)
                == inv_idx).astype(jnp.float32)
    oh_td_t = (jax.lax.broadcasted_iota(jnp.int32, (r_td, tb), 0)
               == td_idx).astype(jnp.float32)

    # Gather on the MXU: (F, R) x (R, TB) -> (F, TB).  HIGHEST keeps the
    # gathered f32 rows exact (no bf16 truncation of the table operand).
    dn = (((1,), (0,)), ((), ()))
    inv_rows = jax.lax.dot_general(inv_tab, oh_inv_t, dn,
                                   preferred_element_type=jnp.float32,
                                   precision=jax.lax.Precision.HIGHEST)
    td_rows = jax.lax.dot_general(td_tab, oh_td_t, dn,
                                  preferred_element_type=jnp.float32,
                                  precision=jax.lax.Precision.HIGHEST)

    # Per-element dot product: reduce over factors (sublane axis) -> (1, TB).
    out_ref[...] = jnp.sum(inv_rows * td_rows, axis=0, keepdims=True)


def matrix_factorization_forward(investor, ticker, date, ticker_date,
                                 investor_factors, ticker_date_factors,
                                 tile_b=1024):
    # `ticker` and `date` are unused in the reference forward; kept for parity.
    del ticker, date
    b = investor.shape[0]
    r_inv, f = investor_factors.shape
    r_td = ticker_date_factors.shape[0]

    # Batch tile: lane-dense, shrunk for small batches; prefer >= 2 tiles so the
    # "parallel" axis can split across v7x's two TensorCores.
    tb = min(int(tile_b), _round_up(b, 128))
    if b > 128 and pl.cdiv(b, tb) < 2:
        tb = max(128, _round_up(pl.cdiv(b, 2), 128))
    num_tiles = pl.cdiv(b, tb)
    b_pad = num_tiles * tb

    # Stack both index vectors -> single (2, B_pad) input: one index DMA per step.
    idx = jnp.stack([investor.astype(jnp.int32),
                     ticker_date.astype(jnp.int32)], axis=0)
    if b_pad != b:
        idx = jnp.pad(idx, ((0, 0), (0, b_pad - b)))   # pad with index 0 (valid row)

    # Tables transposed to (F, R): sublane-pad 10->16 instead of lane-pad 10->128.
    inv_tab = investor_factors.astype(jnp.float32).T
    td_tab = ticker_date_factors.astype(jnp.float32).T

    grid_spec = pltpu.PrefetchScalarGridSpec(
        num_scalar_prefetch=0,
        grid=(num_tiles,),
        in_specs=[
            # Per-tile stacked index block, lane-dense (2, TB).
            pl.BlockSpec((2, tb), lambda t: (0, t)),
            # Full (F, R) embedding tables, resident in VMEM (constant block index).
            pl.BlockSpec((f, r_inv), lambda t: (0, 0)),
            pl.BlockSpec((f, r_td), lambda t: (0, 0)),
        ],
        out_specs=pl.BlockSpec((1, tb), lambda t: (0, t)),
    )

    # VMEM budget from the actual padded footprint (f32 = 4 B):
    #   tables: (F->16 sublanes) x (R->128 lanes), x2 pipeline buffers each
    #   idx (2->8, TB) and out (1->8, TB) blocks, x2 buffers each
    #   kernel temps: two (R->8, TB) one-hot masks + two (F->16, TB) gathered tiles
    f_sub = _round_up(f, 8)
    table_bytes = 2 * 4 * f_sub * (_round_up(r_inv, 128) + _round_up(r_td, 128))
    io_bytes = 2 * (4 * 8 * tb) * 2
    onehot_bytes = 4 * tb * (_round_up(r_inv, 8) + _round_up(r_td, 8))
    temp_bytes = 2 * 4 * f_sub * tb
    vmem_limit = table_bytes + io_bytes + onehot_bytes + temp_bytes + (4 << 20)
    vmem_limit = int(min(max(vmem_limit, 8 << 20), 56 << 20))   # <= v7x 64 MiB physical

    out = pl.pallas_call(
        _mf_dot_kernel,
        out_shape=jax.ShapeDtypeStruct((1, b_pad), jnp.float32),
        grid_spec=grid_spec,
        compiler_params=pltpu.CompilerParams(
            dimension_semantics=("parallel",),   # batch tiles are independent
            vmem_limit_bytes=vmem_limit),
    )(idx, inv_tab, td_tab)

    return out.reshape(b_pad)[:b]


def init_params(key, num_investors, num_tickers, num_dates, num_factors=10):
    # Mirrors nn.init.uniform_(-initrange, initrange), initrange = 1/log(num_factors).
    initrange = 1.0 / math.log(num_factors)
    k1, k2 = jax.random.split(key)
    investor_factors = jax.random.uniform(
        k1, (num_investors, num_factors), jnp.float32, -initrange, initrange)
    ticker_date_factors = jax.random.uniform(
        k2, (num_tickers * num_dates, num_factors), jnp.float32,
        -initrange, initrange)
    return investor_factors, ticker_date_factors


if __name__ == "__main__":
    key = jax.random.PRNGKey(0)
    num_investors, num_tickers, num_dates, num_factors = 32, 6, 5, 10
    batch = 8

    kp, ki, kt, kd = jax.random.split(key, 4)
    investor_factors, ticker_date_factors = init_params(
        kp, num_investors, num_tickers, num_dates, num_factors)

    investor = jax.random.randint(ki, (batch,), 0, num_investors, jnp.int32)
    ticker = jax.random.randint(kt, (batch,), 0, num_tickers, jnp.int32)
    date = jax.random.randint(kd, (batch,), 0, num_dates, jnp.int32)
    ticker_date = ticker * num_dates + date

    out = matrix_factorization_forward(
        investor, ticker, date, ticker_date,
        investor_factors, ticker_date_factors)
    out = jax.block_until_ready(out)

    # Pure-JAX reference (embedding gather + per-row dot).
    ref = jnp.sum(
        investor_factors[investor] * ticker_date_factors[ticker_date], axis=1)
    assert out.shape == (batch,)
    assert jnp.allclose(out, ref, atol=1e-6, rtol=1e-6), (out, ref)
    print("KERNEL_OK")
</pallas_src>

<mosaic_0001>
module attributes {stable_mosaic.version = 11 : i64} {
  func.func @_mf_dot_kernel(%arg0: i32, %arg1: memref<2x128xi32, #tpu.memory_space<vmem>>, %arg2: memref<10x32xf32, #tpu.memory_space<vmem>>, %arg3: memref<10x30xf32, #tpu.memory_space<vmem>>, %arg4: memref<1x128xf32, #tpu.memory_space<vmem>>) attributes {dimension_semantics = [#tpu.dimension_semantics<parallel>], iteration_bounds = array<i64: 1>, scalar_prefetch = 0 : i64, scratch_operands = 0 : i64, tpu.core_type = #tpu.core_type<tc>, window_params = [{transform_indices = @transform_0, window_bounds = array<i64: 2, 128>}, {pipeline_mode = #tpu.pipeline_mode<synchronous>, transform_indices = @transform_1, window_bounds = array<i64: 10, 32>}, {pipeline_mode = #tpu.pipeline_mode<synchronous>, transform_indices = @transform_2, window_bounds = array<i64: 10, 30>}, {transform_indices = @transform_3, window_bounds = array<i64: 1, 128>}]} {
    %c0 = arith.constant 0 : index
    %c0_0 = arith.constant 0 : index
    %0 = vector.load %arg1[%c0, %c0_0] : memref<2x128xi32, #tpu.memory_space<vmem>>, vector<2x128xi32>
    %1 = vector.extract_strided_slice %0 {offsets = [0, 0], sizes = [1, 128], strides = [1, 1]} : vector<2x128xi32> to vector<1x128xi32>
    %2 = vector.extract_strided_slice %0 {offsets = [1, 0], sizes = [1, 128], strides = [1, 1]} : vector<2x128xi32> to vector<1x128xi32>
    %c0_1 = arith.constant 0 : index
    %c0_2 = arith.constant 0 : index
    %3 = vector.load %arg2[%c0_1, %c0_2] : memref<10x32xf32, #tpu.memory_space<vmem>>, vector<10x32xf32>
    %c0_3 = arith.constant 0 : index
    %c0_4 = arith.constant 0 : index
    %4 = vector.load %arg3[%c0_3, %c0_4] : memref<10x30xf32, #tpu.memory_space<vmem>>, vector<10x30xf32>
    %5 = tpu.iota {dimensions = array<i32: 0>} : vector<32x128xi32>
    %6 = vector.broadcast %1 : vector<1x128xi32> to vector<32x128xi32>
    %7 = arith.cmpi eq, %5, %6 : vector<32x128xi32>
    %8 = arith.extui %7 : vector<32x128xi1> to vector<32x128xi32>
    %9 = arith.sitofp %8 : vector<32x128xi32> to vector<32x128xf32>
    %10 = tpu.iota {dimensions = array<i32: 0>} : vector<30x128xi32>
    %11 = vector.broadcast %2 : vector<1x128xi32> to vector<30x128xi32>
    %12 = arith.cmpi eq, %10, %11 : vector<30x128xi32>
    %13 = arith.extui %12 : vector<30x128xi1> to vector<30x128xi32>
    %14 = arith.sitofp %13 : vector<30x128xi32> to vector<30x128xf32>
    %cst = arith.constant dense<0.000000e+00> : vector<10x128xf32>
    %15 = tpu.matmul %3, %9, %cst {dimension_numbers = #tpu.dot_dimension_numbers<[1], [0], [0], [1], [0, 0, 1, 1], [], []>, precision = #tpu.contract_precision<fp32>} : vector<10x32xf32>, vector<32x128xf32>, vector<10x128xf32> -> vector<10x128xf32>
    %cst_5 = arith.constant dense<0.000000e+00> : vector<10x128xf32>
    %16 = tpu.matmul %4, %14, %cst_5 {dimension_numbers = #tpu.dot_dimension_numbers<[1], [0], [0], [1], [0, 0, 1, 1], [], []>, precision = #tpu.contract_precision<fp32>} : vector<10x30xf32>, vector<30x128xf32>, vector<10x128xf32> -> vector<10x128xf32>
    %17 = arith.mulf %15, %16 : vector<10x128xf32>
    %cst_6 = arith.constant dense<0.000000e+00> : vector<128xf32>
    %18 = vector.multi_reduction <add>, %17, %cst_6 [0] : vector<10x128xf32> to vector<128xf32>
    %19 = vector.shape_cast %18 : vector<128xf32> to vector<1x128xf32>
    %c0_7 = arith.constant 0 : index
    %c0_8 = arith.constant 0 : index
    %20 = vector.load %arg4[%c0_7, %c0_8] : memref<1x128xf32, #tpu.memory_space<vmem>>, vector<1x128xf32>
    tpu.vector_store %arg4[%c0_7, %c0_8], %19 {strides = array<i32>} : memref<1x128xf32, #tpu.memory_space<vmem>>, vector<1x128xf32>,
    return
  }
  func.func @transform_0(%arg0: i32) -> (i32, i32) {
    %c0_i32 = arith.constant 0 : i32
    %c0_i32_0 = arith.constant 0 : i32
    return %c0_i32, %arg0 : i32, i32
  }
  func.func @transform_1(%arg0: i32) -> (i32, i32) {
    %c0_i32 = arith.constant 0 : i32
    %c0_i32_0 = arith.constant 0 : i32
    %c0_i32_1 = arith.constant 0 : i32
    return %c0_i32, %c0_i32_0 : i32, i32
  }
  func.func @transform_2(%arg0: i32) -> (i32, i32) {
    %c0_i32 = arith.constant 0 : i32
    %c0_i32_0 = arith.constant 0 : i32
    %c0_i32_1 = arith.constant 0 : i32
    return %c0_i32, %c0_i32_0 : i32, i32
  }
  func.func @transform_3(%arg0: i32) -> (i32, i32) {
    %c0_i32 = arith.constant 0 : i32
    %c0_i32_0 = arith.constant 0 : i32
    return %c0_i32, %arg0 : i32, i32
  }
}

</mosaic_0001>

<llo_original>
// kernel: tpu_custom_call.1
$region0: #{tpu_custom_call.1}
  #allocation0 [shape = 'u32[]', space=smem, size = 0x4, offset = 0x4, fixed_abs, tag = 'smem constant byte address 0x4 - core index']
  #allocation1 [shape = 'u32[72,128]{1,0:T(1,128)}', space=vmem, size = 0x9000, scoped, tag = 'internal scratch']
  %s0 = inlined_call_operand.hbm [shape: s32[2,128], index: 0, kind: input, shape index: {}]
  %s1 = inlined_call_operand.hbm [shape: f32[10,32], index: 1, kind: input, shape index: {}]
  %s2 = inlined_call_operand.hbm [shape: f32[10,30], index: 2, kind: input, shape index: {}]
  %s3 = inlined_call_operand.hbm [shape: f32[1,128], index: 3, kind: output, shape index: {}]
  %s4 = sld [smem:[#allocation0]]
  $region34: #{tpu_custom_call.1} parent=0
    _
  %s6 = ssub.s32 1, %s4
  %s7 = scalar_select 0, %s6, %s4
  $region1: #{tpu_custom_call.1} parent=0
    #allocation2 [shape = 'u8[1024]{0}', space=vmem, size = 0x400, scoped, tag = 'input window, operand 0, single buffered']
    #allocation3 [shape = 's32[1]{0}', space=sflag, size = 0x4, scoped, tag = 'scoped memory for tpu_custom_call.1']
    #allocation4 [shape = 's32[1]{0}', space=sflag, size = 0x4, scoped, tag = 'scoped memory for tpu_custom_call.1']
    #allocation5 [shape = 'u8[8192]{0}', space=vmem, size = 0x2000, scoped, tag = 'input window, operand 1, single buffered']
    #allocation6 [shape = 's32[1]{0}', space=sflag, size = 0x4, scoped, tag = 'scoped memory for tpu_custom_call.1']
    #allocation7 [shape = 'u8[8192]{0}', space=vmem, size = 0x2000, scoped, tag = 'input window, operand 2, single buffered']
    #allocation8 [shape = 'u8[512]{0}', space=vmem, size = 0x400, scoped, tag = 'output window, operand 0, single buffered']
    %8 = vsyncpa [#allocation3], 0
    %9 = vsyncpa [#allocation6], 0
    %10 = vsyncpa [#allocation4], 0
    // Predicated region
    $region2: #{tpu_custom_call.1} parent=1 // pred_check
      _
    $region3: #{tpu_custom_call.1} parent=1 // pred_check_branch
      %12 = sbr.rel (0) target = $region5
    $region4: #{tpu_custom_call.1} parent=1 // pred_region
      %14 = vsyncadd [#allocation3], 0
      %s16 = sshll.u32 %s0, 4
      %s17 = int_to_ptr.hbm [resolvable:$true] %s16
      %s18 = sshll.u32 [#allocation2], 4
      %s19 = int_to_ptr.vmem [resolvable:$true] %s18
      %21 = dma.hbm_to_vmem [thread:$0]  %s17, 32, %s19, [#allocation3]
    $region5: #{tpu_custom_call.1} parent=1 // pred_fallthru
      _
    // Predicated region
    $region6: #{tpu_custom_call.1} parent=1 // pred_check
      _
    $region7: #{tpu_custom_call.1} parent=1 // pred_check_branch
      %23 = sbr.rel (0) target = $region9
    $region8: #{tpu_custom_call.1} parent=1 // pred_region
      %25 = vsyncadd [#allocation6], 0
      %s26 = sshll.u32 %s1, 4
      %s27 = int_to_ptr.hbm [resolvable:$true] %s26
      %s28 = sshll.u32 [#allocation5], 4
      %s29 = int_to_ptr.vmem [resolvable:$true] %s28
      %34 = dma.hbm_to_vmem [thread:$0]  %s27, 256, %s29, [#allocation6], 128, 128, 8
    $region9: #{tpu_custom_call.1} parent=1 // pred_fallthru
      _
    // Predicated region
    $region10: #{tpu_custom_call.1} parent=1 // pred_check
      _
    $region11: #{tpu_custom_call.1} parent=1 // pred_check_branch
      %36 = sbr.rel (0) target = $region13
    $region12: #{tpu_custom_call.1} parent=1 // pred_region
      %38 = vsyncadd [#allocation6], 0
      %s39 = sshll.u32 %s2, 4
      %s40 = int_to_ptr.hbm [resolvable:$true] %s39
      %s41 = sshll.u32 [#allocation7], 4
      %s42 = int_to_ptr.vmem [resolvable:$true] %s41
      %47 = dma.hbm_to_vmem [thread:$0]  %s40, 256, %s42, [#allocation6], 128, 128, 8
    $region13: #{tpu_custom_call.1} parent=1 // pred_fallthru
      _
    // Predicated region
    $region14: #{tpu_custom_call.1} parent=1 // pred_check
      _
    $region15: #{tpu_custom_call.1} parent=1 // pred_check_branch
      %49 = sbr.rel (0) target = $region17
    $region16: #{tpu_custom_call.1} parent=1 // pred_region
      %51 = dma.done [#allocation3], 32
    $region17: #{tpu_custom_call.1} parent=1 // pred_fallthru
      _
    // Predicated region
    $region18: #{tpu_custom_call.1} parent=1 // pred_check
      _
    $region19: #{tpu_custom_call.1} parent=1 // pred_check_branch
      %53 = sbr.rel (0) target = $region21
    $region20: #{tpu_custom_call.1} parent=1 // pred_region
      %55 = dma.done [#allocation6], 256
    $region21: #{tpu_custom_call.1} parent=1 // pred_fallthru
      _
    // Predicated region
    $region22: #{tpu_custom_call.1} parent=1 // pred_check
      _
    $region23: #{tpu_custom_call.1} parent=1 // pred_check_branch
      %57 = sbr.rel (0) target = $region25
    $region24: #{tpu_custom_call.1} parent=1 // pred_region
      %59 = dma.done [#allocation6], 256
    $region25: #{tpu_custom_call.1} parent=1 // pred_fallthru
      _
    %v60 = vld [vmem:[#allocation2] sm:$0x3]
    %v61 = vld [vmem:[#allocation5] sm:$0xff]
    %v62 = vld [vmem:[#allocation5 + $0x8] sm:$0x3]
    %v63 = vld [vmem:[#allocation7] sm:$0xff]
    %v64 = vld [vmem:[#allocation7 + $0x8] sm:$0x3]
    %v65 = vlaneseq
    %v66 = vshrl.u32 %v65, 7
    %v67 = vadd.s32 %v66, 8
    %v68 = vadd.s32 %v66, 16
    %v69 = vadd.s32 %v66, 24
    %v70 = vperm.slane %v60, 0
    %vm71 = vcmp.eq.s32.totalorder %v66, %v70
    %vm72 = vcmp.eq.s32.totalorder %v67, %v70
    %vm73 = vcmp.eq.s32.totalorder %v68, %v70
    %vm74 = vcmp.eq.s32.totalorder %v69, %v70
    %v75 = vsel %vm71, 1, 0
    %v76 = vsel %vm72, 1, 0
    %v77 = vsel %vm73, 1, 0
    %v78 = vsel %vm74, 1, 0
    %v79 = vcvt.s32.f32 %v75
    %v80 = vcvt.s32.f32 %v76
    %v81 = vcvt.s32.f32 %v77
    %v82 = vcvt.s32.f32 %v78
    %v83 = vperm.slane %v60, 1
    %vm84 = vcmp.eq.s32.totalorder %v66, %v83
    %vm85 = vcmp.eq.s32.totalorder %v67, %v83
    %vm86 = vcmp.eq.s32.totalorder %v68, %v83
    %vm87 = vcmp.eq.s32.totalorder %v69, %v83
    %v88 = vsel %vm84, 1, 0
    %v89 = vsel %vm85, 1, 0
    %v90 = vsel %vm86, 1, 0
    %v91 = vsel %vm87, 1, 0
    %v92 = vcvt.s32.f32 %v88
    %v93 = vcvt.s32.f32 %v89
    %v94 = vcvt.s32.f32 %v90
    %v95 = vcvt.s32.f32 %v91
    %vm96 = vcmask 261120
    %v98 = vsel %vm96, %v61, 0
    %v101 = vsel %vm96, %v62, 0
    %103 = vmatpush.msra.mxu0 0.0
    %104 = vmatpush.msra.mxu0 0.0
    %105 = vmatpush.msra.mxu0 0.0
    %106 = vmatpush.msra.mxu0 0.0
    %107 = vmatpush.msra.mxu0 0.0
    %108 = vmatpush.msra.mxu0 0.0
    %109 = vmatpush.msra.mxu0 0.0
    %110 = vmatpush.msra.mxu0 0.0
    %111 = vmatpush.msra.mxu0 0.0
    %112 = vmatpush.msra.mxu0 0.0
    %113 = vmatpush.msra.mxu0 0.0
    %114 = vmatpush.msra.mxu0 0.0
    %v115 = vand.u32 %v82, 4294901760
    %116 = vmatpush.msra.mxu0 %v115
    %v117 = vand.u32 %v81, 4294901760
    %118 = vmatpush.msra.mxu0 %v117
    %v119 = vand.u32 %v80, 4294901760
    %120 = vmatpush.msra.mxu0 %v119
    %v121 = vand.u32 %v79, 4294901760
    %122 = vmatpush.msra.mxu0 %v121
    %v123 = vand.u32 %v98, 4294901760
    %v124 = vsub.f32 %v98, %v123
    %v125 = vand.u32 %v124, 4294901760
    %v126 = vsub.f32 %v124, %v125
    %v127 = vand.u32 %v126, 4294901760
    %128 = vmatmul.f32.gmra.mxu0 %v127
    %v129 = vpop.f32.mrf.mxu0
    %v130 = vadd.f32 0.0, %v129
    %v131 = vand.u32 %v101, 4294901760
    %v132 = vsub.f32 %v101, %v131
    %v133 = vand.u32 %v132, 4294901760
    %v134 = vsub.f32 %v132, %v133
    %v135 = vand.u32 %v134, 4294901760
    %136 = vmatmul.f32.gmra.mxu0 %v135
    %v137 = vpop.f32.mrf.mxu0
    %v138 = vadd.f32 0.0, %v137
    %139 = vdwg.mxu0
    %140 = vmatpush.msra.mxu0 0.0
    %141 = vmatpush.msra.mxu0 0.0
    %142 = vmatpush.msra.mxu0 0.0
    %143 = vmatpush.msra.mxu0 0.0
    %144 = vmatpush.msra.mxu0 0.0
    %145 = vmatpush.msra.mxu0 0.0
    %146 = vmatpush.msra.mxu0 0.0
    %147 = vmatpush.msra.mxu0 0.0
    %148 = vmatpush.msra.mxu0 0.0
    %149 = vmatpush.msra.mxu0 0.0
    %150 = vmatpush.msra.mxu0 0.0
    %151 = vmatpush.msra.mxu0 0.0
    %v152 = vand.u32 %v82, 4294901760
    %v153 = vsub.f32 %v82, %v152
    %v154 = vand.u32 %v153, 4294901760
    %v155 = vsub.f32 %v153, %v154
    %v156 = vand.u32 %v155, 4294901760
    %157 = vmatpush.msra.mxu0 %v156
    %v158 = vand.u32 %v81, 4294901760
    %v159 = vsub.f32 %v81, %v158
    %v160 = vand.u32 %v159, 4294901760
    %v161 = vsub.f32 %v159, %v160
    %v162 = vand.u32 %v161, 4294901760
    %163 = vmatpush.msra.mxu0 %v162
    %v164 = vand.u32 %v80, 4294901760
    %v165 = vsub.f32 %v80, %v164
    %v166 = vand.u32 %v165, 4294901760
    %v167 = vsub.f32 %v165, %v166
    %v168 = vand.u32 %v167, 4294901760
    %169 = vmatpush.msra.mxu0 %v168
    %v170 = vand.u32 %v79, 4294901760
    %v171 = vsub.f32 %v79, %v170
    %v172 = vand.u32 %v171, 4294901760
    %v173 = vsub.f32 %v171, %v172
    %v174 = vand.u32 %v173, 4294901760
    %175 = vmatpush.msra.mxu0 %v174
    %v176 = vand.u32 %v98, 4294901760
    %177 = vmatmul.f32.gmra.mxu0 %v176
    %v178 = vpop.f32.mrf.mxu0
    %v179 = vadd.f32 %v130, %v178
    %v180 = vand.u32 %v101, 4294901760
    %181 = vmatmul.f32.gmra.mxu0 %v180
    %v182 = vpop.f32.mrf.mxu0
    %v183 = vadd.f32 %v138, %v182
    %184 = vdwg.mxu0
    %185 = vmatpush.msra.mxu0 0.0
    %186 = vmatpush.msra.mxu0 0.0
    %187 = vmatpush.msra.mxu0 0.0
    %188 = vmatpush.msra.mxu0 0.0
    %189 = vmatpush.msra.mxu0 0.0
    %190 = vmatpush.msra.mxu0 0.0
    %191 = vmatpush.msra.mxu0 0.0
    %192 = vmatpush.msra.mxu0 0.0
    %193 = vmatpush.msra.mxu0 0.0
    %194 = vmatpush.msra.mxu0 0.0
    %195 = vmatpush.msra.mxu0 0.0
    %196 = vmatpush.msra.mxu0 0.0
    %v197 = vand.u32 %v82, 4294901760
    %v198 = vsub.f32 %v82, %v197
    %199 = vmatpush.msra.mxu0 %v198
    %v200 = vand.u32 %v81, 4294901760
    %v201 = vsub.f32 %v81, %v200
    %202 = vmatpush.msra.mxu0 %v201
    %v203 = vand.u32 %v80, 4294901760
    %v204 = vsub.f32 %v80, %v203
    %205 = vmatpush.msra.mxu0 %v204
    %v206 = vand.u32 %v79, 4294901760
    %v207 = vsub.f32 %v79, %v206
    %208 = vmatpush.msra.mxu0 %v207
    %v209 = vand.u32 %v98, 4294901760
    %v210 = vsub.f32 %v98, %v209
    %211 = vmatmul.f32.gmra.mxu0 %v210
    %v212 = vpop.f32.mrf.mxu0
    %v213 = vadd.f32 %v179, %v212
    %v214 = vand.u32 %v101, 4294901760
    %v215 = vsub.f32 %v101, %v214
    %216 = vmatmul.f32.gmra.mxu0 %v215
    %v217 = vpop.f32.mrf.mxu0
    %v218 = vadd.f32 %v183, %v217
    %219 = vdwg.mxu0
    %220 = vmatpush.msra.mxu0 0.0
    %221 = vmatpush.msra.mxu0 0.0
    %222 = vmatpush.msra.mxu0 0.0
    %223 = vmatpush.msra.mxu0 0.0
    %224 = vmatpush.msra.mxu0 0.0
    %225 = vmatpush.msra.mxu0 0.0
    %226 = vmatpush.msra.mxu0 0.0
    %227 = vmatpush.msra.mxu0 0.0
    %228 = vmatpush.msra.mxu0 0.0
    %229 = vmatpush.msra.mxu0 0.0
    %230 = vmatpush.msra.mxu0 0.0
    %231 = vmatpush.msra.mxu0 0.0
    %v232 = vand.u32 %v82, 4294901760
    %233 = vmatpush.msra.mxu0 %v232
    %v234 = vand.u32 %v81, 4294901760
    %235 = vmatpush.msra.mxu0 %v234
    %v236 = vand.u32 %v80, 4294901760
    %237 = vmatpush.msra.mxu0 %v236
    %v238 = vand.u32 %v79, 4294901760
    %239 = vmatpush.msra.mxu0 %v238
    %v240 = vand.u32 %v98, 4294901760
    %v241 = vsub.f32 %v98, %v240
    %v242 = vand.u32 %v241, 4294901760
    %243 = vmatmul.f32.gmra.mxu0 %v242
    %v244 = vpop.f32.mrf.mxu0
    %v245 = vadd.f32 %v213, %v244
    %v246 = vand.u32 %v101, 4294901760
    %v247 = vsub.f32 %v101, %v246
    %v248 = vand.u32 %v247, 4294901760
    %249 = vmatmul.f32.gmra.mxu0 %v248
    %v250 = vpop.f32.mrf.mxu0
    %v251 = vadd.f32 %v218, %v250
    %252 = vdwg.mxu0
    %253 = vmatpush.msra.mxu0 0.0
    %254 = vmatpush.msra.mxu0 0.0
    %255 = vmatpush.msra.mxu0 0.0
    %256 = vmatpush.msra.mxu0 0.0
    %257 = vmatpush.msra.mxu0 0.0
    %258 = vmatpush.msra.mxu0 0.0
    %259 = vmatpush.msra.mxu0 0.0
    %260 = vmatpush.msra.mxu0 0.0
    %261 = vmatpush.msra.mxu0 0.0
    %262 = vmatpush.msra.mxu0 0.0
    %263 = vmatpush.msra.mxu0 0.0
    %264 = vmatpush.msra.mxu0 0.0
    %v265 = vand.u32 %v82, 4294901760
    %v266 = vsub.f32 %v82, %v265
    %v267 = vand.u32 %v266, 4294901760
    %268 = vmatpush.msra.mxu0 %v267
    %v269 = vand.u32 %v81, 4294901760
    %v270 = vsub.f32 %v81, %v269
    %v271 = vand.u32 %v270, 4294901760
    %272 = vmatpush.msra.mxu0 %v271
    %v273 = vand.u32 %v80, 4294901760
    %v274 = vsub.f32 %v80, %v273
    %v275 = vand.u32 %v274, 4294901760
    %276 = vmatpush.msra.mxu0 %v275
    %v277 = vand.u32 %v79, 4294901760
    %v278 = vsub.f32 %v79, %v277
    %v279 = vand.u32 %v278, 4294901760
    %280 = vmatpush.msra.mxu0 %v279
    %v281 = vand.u32 %v98, 4294901760
    %282 = vmatmul.f32.gmra.mxu0 %v281
    %v283 = vpop.f32.mrf.mxu0
    %v284 = vadd.f32 %v245, %v283
    %v285 = vand.u32 %v101, 4294901760
    %286 = vmatmul.f32.gmra.mxu0 %v285
    %v287 = vpop.f32.mrf.mxu0
    %v288 = vadd.f32 %v251, %v287
    %289 = vdwg.mxu0
    %290 = vmatpush.msra.mxu0 0.0
    %291 = vmatpush.msra.mxu0 0.0
    %292 = vmatpush.msra.mxu0 0.0
    %293 = vmatpush.msra.mxu0 0.0
    %294 = vmatpush.msra.mxu0 0.0
    %295 = vmatpush.msra.mxu0 0.0
    %296 = vmatpush.msra.mxu0 0.0
    %297 = vmatpush.msra.mxu0 0.0
    %298 = vmatpush.msra.mxu0 0.0
    %299 = vmatpush.msra.mxu0 0.0
    %300 = vmatpush.msra.mxu0 0.0
    %301 = vmatpush.msra.mxu0 0.0
    %v302 = vand.u32 %v82, 4294901760
    %303 = vmatpush.msra.mxu0 %v302
    %v304 = vand.u32 %v81, 4294901760
    %305 = vmatpush.msra.mxu0 %v304
    %v306 = vand.u32 %v80, 4294901760
    %307 = vmatpush.msra.mxu0 %v306
    %v308 = vand.u32 %v79, 4294901760
    %309 = vmatpush.msra.mxu0 %v308
    %v310 = vand.u32 %v98, 4294901760
    %311 = vmatmul.f32.gmra.mxu0 %v310
    %v312 = vpop.f32.mrf.mxu0
    %v313 = vadd.f32 %v284, %v312
    %v314 = vand.u32 %v101, 4294901760
    %315 = vmatmul.f32.gmra.mxu0 %v314
    %v316 = vpop.f32.mrf.mxu0
    %v317 = vadd.f32 %v288, %v316
    %318 = vdwg.mxu0
    %vm319 = vcmask 244736
    %v321 = vsel %vm319, %v63, 0
    %v324 = vsel %vm319, %v64, 0
    %vm326 = vcmask 1045504
    %v328 = vsel %vm326, %v95, 0
    %330 = vmatpush.msra.mxu0 0.0
    %331 = vmatpush.msra.mxu0 0.0
    %332 = vmatpush.msra.mxu0 0.0
    %333 = vmatpush.msra.mxu0 0.0
    %334 = vmatpush.msra.mxu0 0.0
    %335 = vmatpush.msra.mxu0 0.0
    %336 = vmatpush.msra.mxu0 0.0
    %337 = vmatpush.msra.mxu0 0.0
    %338 = vmatpush.msra.mxu0 0.0
    %339 = vmatpush.msra.mxu0 0.0
    %340 = vmatpush.msra.mxu0 0.0
    %341 = vmatpush.msra.mxu0 0.0
    %v342 = vand.u32 %v328, 4294901760
    %343 = vmatpush.msra.mxu0 %v342
    %v344 = vand.u32 %v94, 4294901760
    %345 = vmatpush.msra.mxu0 %v344
    %v346 = vand.u32 %v93, 4294901760
    %347 = vmatpush.msra.mxu0 %v346
    %v348 = vand.u32 %v92, 4294901760
    %349 = vmatpush.msra.mxu0 %v348
    %v350 = vand.u32 %v321, 4294901760
    %v351 = vsub.f32 %v321, %v350
    %v352 = vand.u32 %v351, 4294901760
    %v353 = vsub.f32 %v351, %v352
    %v354 = vand.u32 %v353, 4294901760
    %355 = vmatmul.f32.gmra.mxu0 %v354
    %v356 = vpop.f32.mrf.mxu0
    %v357 = vadd.f32 0.0, %v356
    %v358 = vand.u32 %v324, 4294901760
    %v359 = vsub.f32 %v324, %v358
    %v360 = vand.u32 %v359, 4294901760
    %v361 = vsub.f32 %v359, %v360
    %v362 = vand.u32 %v361, 4294901760
    %363 = vmatmul.f32.gmra.mxu0 %v362
    %v364 = vpop.f32.mrf.mxu0
    %v365 = vadd.f32 0.0, %v364
    %366 = vdwg.mxu0
    %367 = vmatpush.msra.mxu0 0.0
    %368 = vmatpush.msra.mxu0 0.0
    %369 = vmatpush.msra.mxu0 0.0
    %370 = vmatpush.msra.mxu0 0.0
    %371 = vmatpush.msra.mxu0 0.0
    %372 = vmatpush.msra.mxu0 0.0
    %373 = vmatpush.msra.mxu0 0.0
    %374 = vmatpush.msra.mxu0 0.0
    %375 = vmatpush.msra.mxu0 0.0
    %376 = vmatpush.msra.mxu0 0.0
    %377 = vmatpush.msra.mxu0 0.0
    %378 = vmatpush.msra.mxu0 0.0
    %v379 = vand.u32 %v328, 4294901760
    %v380 = vsub.f32 %v328, %v379
    %v381 = vand.u32 %v380, 4294901760
    %v382 = vsub.f32 %v380, %v381
    %v383 = vand.u32 %v382, 4294901760
    %384 = vmatpush.msra.mxu0 %v383
    %v385 = vand.u32 %v94, 4294901760
    %v386 = vsub.f32 %v94, %v385
    %v387 = vand.u32 %v386, 4294901760
    %v388 = vsub.f32 %v386, %v387
    %v389 = vand.u32 %v388, 4294901760
    %390 = vmatpush.msra.mxu0 %v389
    %v391 = vand.u32 %v93, 4294901760
    %v392 = vsub.f32 %v93, %v391
    %v393 = vand.u32 %v392, 4294901760
    %v394 = vsub.f32 %v392, %v393
    %v395 = vand.u32 %v394, 4294901760
    %396 = vmatpush.msra.mxu0 %v395
    %v397 = vand.u32 %v92, 4294901760
    %v398 = vsub.f32 %v92, %v397
    %v399 = vand.u32 %v398, 4294901760
    %v400 = vsub.f32 %v398, %v399
    %v401 = vand.u32 %v400, 4294901760
    %402 = vmatpush.msra.mxu0 %v401
    %v403 = vand.u32 %v321, 4294901760
    %404 = vmatmul.f32.gmra.mxu0 %v403
    %v405 = vpop.f32.mrf.mxu0
    %v406 = vadd.f32 %v357, %v405
    %v407 = vand.u32 %v324, 4294901760
    %408 = vmatmul.f32.gmra.mxu0 %v407
    %v409 = vpop.f32.mrf.mxu0
    %v410 = vadd.f32 %v365, %v409
    %411 = vdwg.mxu0
    %412 = vmatpush.msra.mxu0 0.0
    %413 = vmatpush.msra.mxu0 0.0
    %414 = vmatpush.msra.mxu0 0.0
    %415 = vmatpush.msra.mxu0 0.0
    %416 = vmatpush.msra.mxu0 0.0
    %417 = vmatpush.msra.mxu0 0.0
    %418 = vmatpush.msra.mxu0 0.0
    %419 = vmatpush.msra.mxu0 0.0
    %420 = vmatpush.msra.mxu0 0.0
    %421 = vmatpush.msra.mxu0 0.0
    %422 = vmatpush.msra.mxu0 0.0
    %423 = vmatpush.msra.mxu0 0.0
    %v424 = vand.u32 %v328, 4294901760
    %v425 = vsub.f32 %v328, %v424
    %426 = vmatpush.msra.mxu0 %v425
    %v427 = vand.u32 %v94, 4294901760
    %v428 = vsub.f32 %v94, %v427
    %429 = vmatpush.msra.mxu0 %v428
    %v430 = vand.u32 %v93, 4294901760
    %v431 = vsub.f32 %v93, %v430
    %432 = vmatpush.msra.mxu0 %v431
    %v433 = vand.u32 %v92, 4294901760
    %v434 = vsub.f32 %v92, %v433
    %435 = vmatpush.msra.mxu0 %v434
    %v436 = vand.u32 %v321, 4294901760
    %v437 = vsub.f32 %v321, %v436
    %438 = vmatmul.f32.gmra.mxu0 %v437
    %v439 = vpop.f32.mrf.mxu0
    %v440 = vadd.f32 %v406, %v439
    %v441 = vand.u32 %v324, 4294901760
    %v442 = vsub.f32 %v324, %v441
    %443 = vmatmul.f32.gmra.mxu0 %v442
    %v444 = vpop.f32.mrf.mxu0
    %v445 = vadd.f32 %v410, %v444
    %446 = vdwg.mxu0
    %447 = vmatpush.msra.mxu0 0.0
    %448 = vmatpush.msra.mxu0 0.0
    %449 = vmatpush.msra.mxu0 0.0
    %450 = vmatpush.msra.mxu0 0.0
    %451 = vmatpush.msra.mxu0 0.0
    %452 = vmatpush.msra.mxu0 0.0
    %453 = vmatpush.msra.mxu0 0.0
    %454 = vmatpush.msra.mxu0 0.0
    %455 = vmatpush.msra.mxu0 0.0
    %456 = vmatpush.msra.mxu0 0.0
    %457 = vmatpush.msra.mxu0 0.0
    %458 = vmatpush.msra.mxu0 0.0
    %v459 = vand.u32 %v328, 4294901760
    %460 = vmatpush.msra.mxu0 %v459
    %v461 = vand.u32 %v94, 4294901760
    %462 = vmatpush.msra.mxu0 %v461
    %v463 = vand.u32 %v93, 4294901760
    %464 = vmatpush.msra.mxu0 %v463
    %v465 = vand.u32 %v92, 4294901760
    %466 = vmatpush.msra.mxu0 %v465
    %v467 = vand.u32 %v321, 4294901760
    %v468 = vsub.f32 %v321, %v467
    %v469 = vand.u32 %v468, 4294901760
    %470 = vmatmul.f32.gmra.mxu0 %v469
    %v471 = vpop.f32.mrf.mxu0
    %v472 = vadd.f32 %v440, %v471
    %v473 = vand.u32 %v324, 4294901760
    %v474 = vsub.f32 %v324, %v473
    %v475 = vand.u32 %v474, 4294901760
    %476 = vmatmul.f32.gmra.mxu0 %v475
    %v477 = vpop.f32.mrf.mxu0
    %v478 = vadd.f32 %v445, %v477
    %479 = vdwg.mxu0
    %480 = vmatpush.msra.mxu0 0.0
    %481 = vmatpush.msra.mxu0 0.0
    %482 = vmatpush.msra.mxu0 0.0
    %483 = vmatpush.msra.mxu0 0.0
    %484 = vmatpush.msra.mxu0 0.0
    %485 = vmatpush.msra.mxu0 0.0
    %486 = vmatpush.msra.mxu0 0.0
    %487 = vmatpush.msra.mxu0 0.0
    %488 = vmatpush.msra.mxu0 0.0
    %489 = vmatpush.msra.mxu0 0.0
    %490 = vmatpush.msra.mxu0 0.0
    %491 = vmatpush.msra.mxu0 0.0
    %v492 = vand.u32 %v328, 4294901760
    %v493 = vsub.f32 %v328, %v492
    %v494 = vand.u32 %v493, 4294901760
    %495 = vmatpush.msra.mxu0 %v494
    %v496 = vand.u32 %v94, 4294901760
    %v497 = vsub.f32 %v94, %v496
    %v498 = vand.u32 %v497, 4294901760
    %499 = vmatpush.msra.mxu0 %v498
    %v500 = vand.u32 %v93, 4294901760
    %v501 = vsub.f32 %v93, %v500
    %v502 = vand.u32 %v501, 4294901760
    %503 = vmatpush.msra.mxu0 %v502
    %v504 = vand.u32 %v92, 4294901760
    %v505 = vsub.f32 %v92, %v504
    %v506 = vand.u32 %v505, 4294901760
    %507 = vmatpush.msra.mxu0 %v506
    %v508 = vand.u32 %v321, 4294901760
    %509 = vmatmul.f32.gmra.mxu0 %v508
    %v510 = vpop.f32.mrf.mxu0
    %v511 = vadd.f32 %v472, %v510
    %v512 = vand.u32 %v324, 4294901760
    %513 = vmatmul.f32.gmra.mxu0 %v512
    %v514 = vpop.f32.mrf.mxu0
    %v515 = vadd.f32 %v478, %v514
    %516 = vdwg.mxu0
    %517 = vmatpush.msra.mxu0 0.0
    %518 = vmatpush.msra.mxu0 0.0
    %519 = vmatpush.msra.mxu0 0.0
    %520 = vmatpush.msra.mxu0 0.0
    %521 = vmatpush.msra.mxu0 0.0
    %522 = vmatpush.msra.mxu0 0.0
    %523 = vmatpush.msra.mxu0 0.0
    %524 = vmatpush.msra.mxu0 0.0
    %525 = vmatpush.msra.mxu0 0.0
    %526 = vmatpush.msra.mxu0 0.0
    %527 = vmatpush.msra.mxu0 0.0
    %528 = vmatpush.msra.mxu0 0.0
    %v529 = vand.u32 %v328, 4294901760
    %530 = vmatpush.msra.mxu0 %v529
    %v531 = vand.u32 %v94, 4294901760
    %532 = vmatpush.msra.mxu0 %v531
    %v533 = vand.u32 %v93, 4294901760
    %534 = vmatpush.msra.mxu0 %v533
    %v535 = vand.u32 %v92, 4294901760
    %536 = vmatpush.msra.mxu0 %v535
    %v537 = vand.u32 %v321, 4294901760
    %538 = vmatmul.f32.gmra.mxu0 %v537
    %v539 = vpop.f32.mrf.mxu0
    %v540 = vadd.f32 %v511, %v539
    %v541 = vand.u32 %v324, 4294901760
    %542 = vmatmul.f32.gmra.mxu0 %v541
    %v543 = vpop.f32.mrf.mxu0
    %v544 = vadd.f32 %v515, %v543
    %545 = vdwg.mxu0
    %v546 = vmul.f32 %v313, %v540
    %v547 = vmul.f32 %v317, %v544
    %vm548 = vcmask 1041408
    %v549 = vsel %vm548, %v547, 0.0
    %v550 = vadd.f32 %v546, %v549
    %v551 = vrot.slane %v550, 4
    %v552 = vadd.f32 %v550, %v551
    %v553 = vrot.slane %v552, 2
    %v554 = vadd.f32 %v552, %v553
    %v555 = vrot.slane %v554, 1
    %v556 = vadd.f32 %v554, %v555
    %557 = vst [vmem:[#allocation8] sm:$0x1] %v556
    // Predicated region
    $region26: #{tpu_custom_call.1} parent=1 // pred_check
      _
    $region27: #{tpu_custom_call.1} parent=1 // pred_check_branch
      %559 = sbr.rel (0) target = $region29
    $region28: #{tpu_custom_call.1} parent=1 // pred_region
      %561 = vsyncadd [#allocation4], 0
      %s563 = sshll.u32 [#allocation8], 4
      %s564 = int_to_ptr.vmem [resolvable:$true] %s563
      %s565 = sshll.u32 %s3, 4
      %s566 = int_to_ptr.hbm [resolvable:$true] %s565
      %568 = dma.vmem_to_hbm [thread:$0]  %s564, 16, %s566, [#allocation4]
    $region29: #{tpu_custom_call.1} parent=1 // pred_fallthru
      _
    // Predicated region
    $region30: #{tpu_custom_call.1} parent=1 // pred_check
      _
    $region31: #{tpu_custom_call.1} parent=1 // pred_check_branch
      %570 = sbr.rel (0) target = $region33
    $region32: #{tpu_custom_call.1} parent=1 // pred_region
      %572 = dma.done [#allocation4], 16
    $region33: #{tpu_custom_call.1} parent=1 // pred_fallthru
      _
    %573 = vsyncpa [#allocation3], 1
    %574 = vsyncpa [#allocation6], 1
    %575 = vsyncpa [#allocation4], 1

</llo_original>
